<compile_context>
chip_gen: v6e
topology: v6e:2x2x1
jax: 0.10.0
libtpu: 0.0.40
codegen_flags: <defaults>
</compile_context>

<pallas_src>
import functools

import jax
import jax.numpy as jnp
from jax import lax
from jax.experimental import pallas as pl
from jax.experimental.pallas import tpu as pltpu


# ----------------------------------------------------------------------------
# Pallas kernel
# ----------------------------------------------------------------------------
def _root_kernel(*refs, num_children, residual, use_mxu, mxu_dtype):
    """Fused Root: sum_i (W_i @ x_i) + bias [+ x_0] -> ReLU.

    refs layout:
      x_0 .. x_{k-1} : (1, C_i, T)     child activations, spatial tile T in lanes
      w_0 .. w_{k-1} : (Cout, C_i)     BN-scale-folded 1x1 conv weight slices
      bias           : (Cout, 1)       folded BN bias (f32)
      out            : (1, Cout, T)
    """
    k = num_children
    x_refs = refs[:k]
    w_refs = refs[k:2 * k]
    bias_ref = refs[2 * k]
    o_ref = refs[2 * k + 1]

    acc = None
    if use_mxu:
        # One MXU matmul per child, bf16 operands, f32 accumulation.
        for i in range(k):
            xi = x_refs[i][0]                      # (C_i, T), resident in VMEM
            if xi.dtype != mxu_dtype:
                xi = xi.astype(mxu_dtype)
            p = jnp.dot(w_refs[i][...], xi, preferred_element_type=jnp.float32)
            acc = p if acc is None else acc + p
    else:
        # Tiny-channel VPU path: unrolled broadcast FMAs, no MXU pad/relayout.
        for i in range(k):
            xi = x_refs[i][0].astype(jnp.float32)          # (C_i, T)
            wi = w_refs[i][...].astype(jnp.float32)        # (Cout, C_i)
            ci = wi.shape[1]
            for c in range(ci):
                term = wi[:, c:c + 1] * xi[c:c + 1, :]     # (Cout, T) via broadcast
                acc = term if acc is None else acc + term

    y = acc + bias_ref[...].astype(jnp.float32)            # (Cout,1) broadcast
    if residual:
        # children[0] tile is already in VMEM -- reuse it, no extra HBM read.
        y = y + x_refs[0][0].astype(jnp.float32)
    y = jnp.maximum(y, 0.0)
    o_ref[0] = y.astype(o_ref.dtype)


# ----------------------------------------------------------------------------
# Tile planning (VMEM-budget driven)
# ----------------------------------------------------------------------------
def _round_up(x, m):
    return (x + m - 1) // m * m


def _plan_tiles(hw, n, c_sizes, cout, x_bytes, w_bytes):
    """Pick a lane-aligned spatial tile T, padded extent, and a VMEM limit."""
    cin = sum(c_sizes)
    budget = 24 << 20                                   # per-step VMEM target
    # Constant-per-step footprint: double-buffered weight slices + bias tile.
    fixed = 2 * cout * cin * w_bytes + 2 * _round_up(cout, 8) * 128 * 4
    # Per-lane-element footprint: double-buffered inputs + outputs + f32 acc.
    per_t = 2 * cin * x_bytes + 2 * cout * x_bytes + 4 * cout
    t_budget = max(128, (max(budget - fixed, 0) // max(per_t, 1)) // 128 * 128)
    t_budget = min(t_budget, 4096)                      # diminishing returns past this

    hw128 = _round_up(hw, 128)
    t = min(t_budget, hw128)
    # v7x has 2 TensorCores: when N == 1, make sure the spatial axis supplies
    # at least 2 parallel grid iterations (no-op on single-TC v5e/v6e).
    if n == 1 and hw128 >= 256:
        t = min(t, _round_up(hw128 // 2, 128))
    t = max(128, (t // 128) * 128)

    hw_pad = _round_up(hw, t)
    vmem_need = fixed + per_t * t + (2 << 20)           # + compiler slack
    vmem_limit = int(min(max(vmem_need, 32 << 20), 48 << 20))
    return t, hw_pad, vmem_limit


# ----------------------------------------------------------------------------
# Wrapper
# ----------------------------------------------------------------------------
@functools.partial(jax.jit, static_argnames=("residual",))
def root_forward(children, weight, bn_params, residual=True):
    """Root.forward.

    children  : list/tuple of (N, C_i, H, W) arrays (NCHW, PyTorch convention)
    weight    : (Cout, Cin_total, 1, 1) 1x1 conv weight (PyTorch layout)
    bn_params : dict with 'gamma','beta','mean','var', each (Cout,)
    """
    children = list(children)
    k = len(children)
    dt = children[0].dtype
    for c in children:
        assert c.dtype == dt, "all children must share a dtype"
    N, _, H, W = children[0].shape
    HW = H * W
    Cout, Cin = weight.shape[0], weight.shape[1]
    c_sizes = [int(c.shape[1]) for c in children]
    assert sum(c_sizes) == Cin, "channel concat mismatch"
    if residual:
        assert c_sizes[0] == Cout, "residual requires children[0] channels == out_channels"

    # Fold inference BatchNorm into the conv weights / a bias vector (trace time).
    eps = 1e-5
    scale = bn_params["gamma"].astype(jnp.float32) * lax.rsqrt(
        bn_params["var"].astype(jnp.float32) + eps)                     # (Cout,)
    bias = bn_params["beta"].astype(jnp.float32) - bn_params["mean"].astype(jnp.float32) * scale
    w2d = weight.reshape(Cout, Cin).astype(jnp.float32) * scale[:, None]  # (Cout, Cin)

    # Path selection: tiny channel counts -> VPU broadcast-FMA path (f32),
    # otherwise MXU matmuls with bf16 operands (f32 accumulation).
    use_mxu = (Cin > 16) or (Cout > 16)
    w_dtype = jnp.bfloat16 if use_mxu else jnp.float32
    w2d = w2d.astype(w_dtype)

    # Split the weight along Cin so the concat never materializes in HBM.
    w_parts, off = [], 0
    for c in c_sizes:
        w_parts.append(w2d[:, off:off + c])
        off += c
    bias2d = bias.reshape(Cout, 1)

    x_bytes = jnp.dtype(dt).itemsize
    w_bytes = jnp.dtype(w_dtype).itemsize
    T, HW_pad, vmem_limit = _plan_tiles(HW, N, c_sizes, Cout, x_bytes, w_bytes)

    # Flatten spatial dims (free reshape) and pad the lane axis to a multiple
    # of the tile so every block is lane-aligned and the grid stays pipelined.
    x_flat = [c.reshape(N, ci, HW) for c, ci in zip(children, c_sizes)]
    if HW_pad != HW:
        x_flat = [jnp.pad(x, ((0, 0), (0, 0), (0, HW_pad - HW))) for x in x_flat]

    grid = (N, HW_pad // T)

    in_specs = []
    for ci in c_sizes:
        in_specs.append(pl.BlockSpec((1, ci, T), lambda n, s: (n, 0, s)))
    for ci in c_sizes:
        in_specs.append(pl.BlockSpec((Cout, ci), lambda n, s: (0, 0)))
    in_specs.append(pl.BlockSpec((Cout, 1), lambda n, s: (0, 0)))

    kernel = functools.partial(_root_kernel, num_children=k, residual=residual,
                               use_mxu=use_mxu, mxu_dtype=jnp.bfloat16)

    flops = 2 * Cout * Cin * N * HW_pad + 3 * Cout * N * HW_pad
    bytes_accessed = ((sum(c_sizes) + Cout) * N * HW_pad * x_bytes
                      + Cout * Cin * w_bytes + Cout * 4)
    cost = pl.CostEstimate(flops=int(flops), transcendentals=0,
                           bytes_accessed=int(bytes_accessed))

    out_flat = pl.pallas_call(
        kernel,
        out_shape=jax.ShapeDtypeStruct((N, Cout, HW_pad), dt),
        grid_spec=pltpu.PrefetchScalarGridSpec(
            num_scalar_prefetch=0,
            grid=grid,
            in_specs=in_specs,
            out_specs=pl.BlockSpec((1, Cout, T), lambda n, s: (n, 0, s)),
        ),
        compiler_params=pltpu.CompilerParams(
            dimension_semantics=("parallel", "parallel"),
            vmem_limit_bytes=vmem_limit),
        cost_estimate=cost,
    )(*x_flat, *w_parts, bias2d)

    if HW_pad != HW:
        out_flat = out_flat[..., :HW]
    return out_flat.reshape(N, Cout, H, W)


# ----------------------------------------------------------------------------
# Pure-JAX reference (correctness check)
# ----------------------------------------------------------------------------
def root_reference(children, weight, bn_params, residual=True):
    x = jnp.concatenate(list(children), axis=1)               # (N, Cin, H, W)
    Cout, Cin = weight.shape[0], weight.shape[1]
    y = jnp.einsum("oc,nchw->nohw", weight.reshape(Cout, Cin), x)
    eps = 1e-5
    scale = bn_params["gamma"] / jnp.sqrt(bn_params["var"] + eps)
    bias = bn_params["beta"] - bn_params["mean"] * scale
    y = y * scale[None, :, None, None] + bias[None, :, None, None]
    if residual:
        y = y + children[0]
    return jax.nn.relu(y)


# ----------------------------------------------------------------------------
# Deterministic parameter init + smoke tests
# ----------------------------------------------------------------------------
def make_params(key, in_channels, out_channels):
    kw, kg, kb, km, kv = jax.random.split(key, 5)
    weight = (jax.random.normal(kw, (out_channels, in_channels, 1, 1), jnp.float32)
              / (in_channels ** 0.5))
    bn = {
        "gamma": 1.0 + 0.1 * jax.random.normal(kg, (out_channels,), jnp.float32),
        "beta": 0.1 * jax.random.normal(kb, (out_channels,), jnp.float32),
        "mean": 0.1 * jax.random.normal(km, (out_channels,), jnp.float32),
        "var": jnp.abs(1.0 + 0.1 * jax.random.normal(kv, (out_channels,), jnp.float32)),
    }
    return weight, bn


if __name__ == "__main__":
    key = jax.random.PRNGKey(0)

    # --- Test 1: typical small Root (tiny channels -> VPU path, f32 exact) ---
    k1, k2, kp = jax.random.split(key, 3)
    N, H, W = 2, 16, 16
    C0, C1, Cout = 4, 4, 4
    children = [
        jax.random.normal(k1, (N, C0, H, W), jnp.float32),
        jax.random.normal(k2, (N, C1, H, W), jnp.float32),
    ]
    weight, bn = make_params(kp, in_channels=C0 + C1, out_channels=Cout)
    out = jax.block_until_ready(root_forward(children, weight, bn, residual=True))
    ref = root_reference(children, weight, bn, residual=True)
    assert out.shape == (N, Cout, H, W)
    assert jnp.max(jnp.abs(out - ref)) < 1e-4, "mismatch vs reference (VPU path)"

    # --- Test 2: larger channels, non-128-aligned H*W -> MXU bf16 path + padding ---
    k3, k4, kp2 = jax.random.split(jax.random.PRNGKey(1), 3)
    N2, H2, W2 = 1, 20, 20                       # H*W = 400, not 128-aligned
    C0b, C1b, Coutb = 64, 64, 64
    children2 = [
        jax.random.normal(k3, (N2, C0b, H2, W2), jnp.float32),
        jax.random.normal(k4, (N2, C1b, H2, W2), jnp.float32),
    ]
    weight2, bn2 = make_params(kp2, in_channels=C0b + C1b, out_channels=Coutb)
    out2 = jax.block_until_ready(root_forward(children2, weight2, bn2, residual=True))
    ref2 = root_reference(children2, weight2, bn2, residual=True)
    assert out2.shape == (N2, Coutb, H2, W2)
    # bf16 MXU operands (f32 accumulation) -> slightly looser tolerance.
    assert jnp.max(jnp.abs(out2 - ref2)) < 5e-2, "mismatch vs reference (MXU bf16 path)"

    print("KERNEL_OK")
</pallas_src>

<mosaic_0001>
module attributes {stable_mosaic.version = 11 : i64} {
  func.func @_root_kernel(%arg0: i32, %arg1: i32, %arg2: memref<1x4x256xf32, #tpu.memory_space<vmem>>, %arg3: memref<1x4x256xf32, #tpu.memory_space<vmem>>, %arg4: memref<4x4xf32, #tpu.memory_space<vmem>>, %arg5: memref<4x4xf32, #tpu.memory_space<vmem>>, %arg6: memref<4x1xf32, #tpu.memory_space<vmem>>, %arg7: memref<1x4x256xf32, #tpu.memory_space<vmem>>) attributes {dimension_semantics = [#tpu.dimension_semantics<parallel>, #tpu.dimension_semantics<parallel>], iteration_bounds = array<i64: 2, 1>, scalar_prefetch = 0 : i64, scratch_operands = 0 : i64, tpu.core_type = #tpu.core_type<tc>, window_params = [{transform_indices = @transform_0, window_bounds = array<i64: 1, 4, 256>}, {transform_indices = @transform_1, window_bounds = array<i64: 1, 4, 256>}, {pipeline_mode = #tpu.pipeline_mode<synchronous>, transform_indices = @transform_2, window_bounds = array<i64: 4, 4>}, {pipeline_mode = #tpu.pipeline_mode<synchronous>, transform_indices = @transform_3, window_bounds = array<i64: 4, 4>}, {pipeline_mode = #tpu.pipeline_mode<synchronous>, transform_indices = @transform_4, window_bounds = array<i64: 4, 1>}, {transform_indices = @transform_5, window_bounds = array<i64: 1, 4, 256>}]} {
    %c0 = arith.constant 0 : index
    %c0_0 = arith.constant 0 : index
    %c0_1 = arith.constant 0 : index
    %0 = vector.load %arg2[%c0, %c0_0, %c0_1] : memref<1x4x256xf32, #tpu.memory_space<vmem>>, vector<1x4x256xf32>
    %1 = vector.shape_cast %0 : vector<1x4x256xf32> to vector<4x256xf32>
    %c0_2 = arith.constant 0 : index
    %c0_3 = arith.constant 0 : index
    %2 = vector.load %arg4[%c0_2, %c0_3] : memref<4x4xf32, #tpu.memory_space<vmem>>, vector<4x4xf32>
    %3 = vector.extract_strided_slice %2 {offsets = [0, 0], sizes = [4, 1], strides = [1, 1]} : vector<4x4xf32> to vector<4x1xf32>
    %4 = vector.extract_strided_slice %1 {offsets = [0, 0], sizes = [1, 256], strides = [1, 1]} : vector<4x256xf32> to vector<1x256xf32>
    %5 = vector.broadcast %3 : vector<4x1xf32> to vector<4x256xf32>
    %6 = vector.broadcast %4 : vector<1x256xf32> to vector<4x256xf32>
    %7 = arith.mulf %5, %6 : vector<4x256xf32>
    %8 = vector.extract_strided_slice %2 {offsets = [0, 1], sizes = [4, 1], strides = [1, 1]} : vector<4x4xf32> to vector<4x1xf32>
    %9 = vector.extract_strided_slice %1 {offsets = [1, 0], sizes = [1, 256], strides = [1, 1]} : vector<4x256xf32> to vector<1x256xf32>
    %10 = vector.broadcast %8 : vector<4x1xf32> to vector<4x256xf32>
    %11 = vector.broadcast %9 : vector<1x256xf32> to vector<4x256xf32>
    %12 = arith.mulf %10, %11 : vector<4x256xf32>
    %13 = arith.addf %7, %12 : vector<4x256xf32>
    %14 = vector.extract_strided_slice %2 {offsets = [0, 2], sizes = [4, 1], strides = [1, 1]} : vector<4x4xf32> to vector<4x1xf32>
    %15 = vector.extract_strided_slice %1 {offsets = [2, 0], sizes = [1, 256], strides = [1, 1]} : vector<4x256xf32> to vector<1x256xf32>
    %16 = vector.broadcast %14 : vector<4x1xf32> to vector<4x256xf32>
    %17 = vector.broadcast %15 : vector<1x256xf32> to vector<4x256xf32>
    %18 = arith.mulf %16, %17 : vector<4x256xf32>
    %19 = arith.addf %13, %18 : vector<4x256xf32>
    %20 = vector.extract_strided_slice %2 {offsets = [0, 3], sizes = [4, 1], strides = [1, 1]} : vector<4x4xf32> to vector<4x1xf32>
    %21 = vector.extract_strided_slice %1 {offsets = [3, 0], sizes = [1, 256], strides = [1, 1]} : vector<4x256xf32> to vector<1x256xf32>
    %22 = vector.broadcast %20 : vector<4x1xf32> to vector<4x256xf32>
    %23 = vector.broadcast %21 : vector<1x256xf32> to vector<4x256xf32>
    %24 = arith.mulf %22, %23 : vector<4x256xf32>
    %25 = arith.addf %19, %24 : vector<4x256xf32>
    %c0_4 = arith.constant 0 : index
    %c0_5 = arith.constant 0 : index
    %c0_6 = arith.constant 0 : index
    %26 = vector.load %arg3[%c0_4, %c0_5, %c0_6] : memref<1x4x256xf32, #tpu.memory_space<vmem>>, vector<1x4x256xf32>
    %27 = vector.shape_cast %26 : vector<1x4x256xf32> to vector<4x256xf32>
    %c0_7 = arith.constant 0 : index
    %c0_8 = arith.constant 0 : index
    %28 = vector.load %arg5[%c0_7, %c0_8] : memref<4x4xf32, #tpu.memory_space<vmem>>, vector<4x4xf32>
    %29 = vector.extract_strided_slice %28 {offsets = [0, 0], sizes = [4, 1], strides = [1, 1]} : vector<4x4xf32> to vector<4x1xf32>
    %30 = vector.extract_strided_slice %27 {offsets = [0, 0], sizes = [1, 256], strides = [1, 1]} : vector<4x256xf32> to vector<1x256xf32>
    %31 = vector.broadcast %29 : vector<4x1xf32> to vector<4x256xf32>
    %32 = vector.broadcast %30 : vector<1x256xf32> to vector<4x256xf32>
    %33 = arith.mulf %31, %32 : vector<4x256xf32>
    %34 = arith.addf %25, %33 : vector<4x256xf32>
    %35 = vector.extract_strided_slice %28 {offsets = [0, 1], sizes = [4, 1], strides = [1, 1]} : vector<4x4xf32> to vector<4x1xf32>
    %36 = vector.extract_strided_slice %27 {offsets = [1, 0], sizes = [1, 256], strides = [1, 1]} : vector<4x256xf32> to vector<1x256xf32>
    %37 = vector.broadcast %35 : vector<4x1xf32> to vector<4x256xf32>
    %38 = vector.broadcast %36 : vector<1x256xf32> to vector<4x256xf32>
    %39 = arith.mulf %37, %38 : vector<4x256xf32>
    %40 = arith.addf %34, %39 : vector<4x256xf32>
    %41 = vector.extract_strided_slice %28 {offsets = [0, 2], sizes = [4, 1], strides = [1, 1]} : vector<4x4xf32> to vector<4x1xf32>
    %42 = vector.extract_strided_slice %27 {offsets = [2, 0], sizes = [1, 256], strides = [1, 1]} : vector<4x256xf32> to vector<1x256xf32>
    %43 = vector.broadcast %41 : vector<4x1xf32> to vector<4x256xf32>
    %44 = vector.broadcast %42 : vector<1x256xf32> to vector<4x256xf32>
    %45 = arith.mulf %43, %44 : vector<4x256xf32>
    %46 = arith.addf %40, %45 : vector<4x256xf32>
    %47 = vector.extract_strided_slice %28 {offsets = [0, 3], sizes = [4, 1], strides = [1, 1]} : vector<4x4xf32> to vector<4x1xf32>
    %48 = vector.extract_strided_slice %27 {offsets = [3, 0], sizes = [1, 256], strides = [1, 1]} : vector<4x256xf32> to vector<1x256xf32>
    %49 = vector.broadcast %47 : vector<4x1xf32> to vector<4x256xf32>
    %50 = vector.broadcast %48 : vector<1x256xf32> to vector<4x256xf32>
    %51 = arith.mulf %49, %50 : vector<4x256xf32>
    %52 = arith.addf %46, %51 : vector<4x256xf32>
    %c0_9 = arith.constant 0 : index
    %c0_10 = arith.constant 0 : index
    %53 = vector.load %arg6[%c0_9, %c0_10] : memref<4x1xf32, #tpu.memory_space<vmem>>, vector<4x1xf32>
    %54 = vector.broadcast %53 : vector<4x1xf32> to vector<4x256xf32>
    %55 = arith.addf %52, %54 : vector<4x256xf32>
    %c0_11 = arith.constant 0 : index
    %c0_12 = arith.constant 0 : index
    %c0_13 = arith.constant 0 : index
    %56 = vector.load %arg2[%c0_11, %c0_12, %c0_13] : memref<1x4x256xf32, #tpu.memory_space<vmem>>, vector<1x4x256xf32>
    %57 = vector.shape_cast %56 : vector<1x4x256xf32> to vector<4x256xf32>
    %58 = arith.addf %55, %57 : vector<4x256xf32>
    %cst = arith.constant 0.000000e+00 : f32
    %59 = vector.broadcast %cst : f32 to vector<4x256xf32>
    %60 = arith.maximumf %58, %59 : vector<4x256xf32>
    %c0_14 = arith.constant 0 : index
    %c0_15 = arith.constant 0 : index
    %c0_16 = arith.constant 0 : index
    %61 = vector.load %arg7[%c0_14, %c0_15, %c0_16] : memref<1x4x256xf32, #tpu.memory_space<vmem>>, vector<1x4x256xf32>
    %62 = vector.shape_cast %61 : vector<1x4x256xf32> to vector<4x256xf32>
    %63 = vector.shape_cast %60 : vector<4x256xf32> to vector<1x4x256xf32>
    tpu.vector_store %arg7[%c0_14, %c0_15, %c0_16], %63 {strides = array<i32>} : memref<1x4x256xf32, #tpu.memory_space<vmem>>, vector<1x4x256xf32>,
    return
  }
  func.func @transform_0(%arg0: i32, %arg1: i32) -> (i32, i32, i32) {
    %c0_i32 = arith.constant 0 : i32
    %c0_i32_0 = arith.constant 0 : i32
    return %arg0, %c0_i32, %arg1 : i32, i32, i32
  }
  func.func @transform_1(%arg0: i32, %arg1: i32) -> (i32, i32, i32) {
    %c0_i32 = arith.constant 0 : i32
    %c0_i32_0 = arith.constant 0 : i32
    return %arg0, %c0_i32, %arg1 : i32, i32, i32
  }
  func.func @transform_2(%arg0: i32, %arg1: i32) -> (i32, i32) {
    %c0_i32 = arith.constant 0 : i32
    %c0_i32_0 = arith.constant 0 : i32
    %c0_i32_1 = arith.constant 0 : i32
    return %c0_i32, %c0_i32_0 : i32, i32
  }
  func.func @transform_3(%arg0: i32, %arg1: i32) -> (i32, i32) {
    %c0_i32 = arith.constant 0 : i32
    %c0_i32_0 = arith.constant 0 : i32
    %c0_i32_1 = arith.constant 0 : i32
    return %c0_i32, %c0_i32_0 : i32, i32
  }
  func.func @transform_4(%arg0: i32, %arg1: i32) -> (i32, i32) {
    %c0_i32 = arith.constant 0 : i32
    %c0_i32_0 = arith.constant 0 : i32
    %c0_i32_1 = arith.constant 0 : i32
    return %c0_i32, %c0_i32_0 : i32, i32
  }
  func.func @transform_5(%arg0: i32, %arg1: i32) -> (i32, i32, i32) {
    %c0_i32 = arith.constant 0 : i32
    %c0_i32_0 = arith.constant 0 : i32
    return %arg0, %c0_i32, %arg1 : i32, i32, i32
  }
}

</mosaic_0001>

<llo_original>
// kernel: root_forward.1
$region0: #{root_forward.1}
  #allocation0 [shape = 'u32[]', space=smem, size = 0x4, offset = 0x4, fixed_abs, tag = 'smem constant byte address 0x4 - core index']
  #allocation1 [shape = 'u32[144,128]{1,0:T(1,128)}', space=vmem, size = 0x12000, scoped, tag = 'internal scratch']
  %s0 = inlined_call_operand.vmem [shape: f32[2,4,256], index: 0, kind: input, shape index: {}]
  %s1 = inlined_call_operand.vmem [shape: f32[2,4,256], index: 1, kind: input, shape index: {}]
  %s2 = inlined_call_operand.vmem [shape: f32[4,4], index: 2, kind: input, shape index: {}]
  %s3 = inlined_call_operand.vmem [shape: f32[4,4], index: 3, kind: input, shape index: {}]
  %s4 = inlined_call_operand.vmem [shape: f32[4,1], index: 4, kind: input, shape index: {}]
  %s5 = inlined_call_operand.vmem [shape: f32[2,4,256], index: 5, kind: output, shape index: {}]
  %s6 = sld [smem:[#allocation0]]
  $region53: #{root_forward.1} parent=0
    _
  %s8 = ssub.s32 1, %s6
  %s9 = scalar_select 0, %s8, %s6
  loop: start=0, step=1, limit=4
  $region2: #{root_forward.1} parent=0 // loop_pre_header
    _
  $region3: #{root_forward.1} parent=0 // loop_header
    %s11 = sphi 0, %s15
    %p12 = scmp.ge.s32.totalorder %s11, 4
    %s18 = sphi 0, %s30
    %s19 = sphi 0, %s26
    %s20 = sphi 0, %s18
    %s21 = sphi 0, %s19
    %s22 = sphi 0, %s20
    %s23 = sphi 0, %s21
    %s35 = sphi 0, %s37
    %s38 = sphi 0, %s35
    %s39 = sphi 0, %s38
    %s55 = sphi 0, %s39
    %s63 = sphi 0, %s65
    %s66 = sphi 0, %s63
    %s67 = sphi 0, %s66
    %s83 = sphi 0, %s67
    %s87 = sphi 0, %s87
    %s89 = sphi 0, %s87
    %s90 = sphi 0, %s89
    %s104 = sphi 0, %s90
    %s108 = sphi 0, %s108
    %s110 = sphi 0, %s108
    %s111 = sphi 0, %s110
    %s125 = sphi 0, %s111
    %s129 = sphi 0, %s129
    %s131 = sphi 0, %s129
    %s132 = sphi 0, %s131
    %s146 = sphi 0, %s132
    %s154 = sphi 0, %s156
    %s157 = sphi 0, %s154
    %s158 = sphi 0, %s157
    %s174 = sphi 0, %s158
  $region4: #{root_forward.1} parent=0 // loop_header_branch
    %14 = sbr.rel (%p12) target = $region8
  $region5: #{root_forward.1} parent=0 // loop_body
    %s16 = ssub.s32 %s11, 1
    %s17 = ssub.s32 %s11, 2
    %s24 = sadd.s32 1, %s19
    %p25 = scmp.ge.s32.totalorder %s24, 1
    %s26 = scalar_select %p25, 0, %s24
    %s27 = sadd.s32 1, %s18
    %s28 = scalar_select %p25, %s27, %s18
    %p29 = scmp.ge.s32.totalorder %s28, 2
    %s30 = scalar_select %p29, 0, %s28
    %s31 = ssub.s32 %s18, %s30
    %s32 = ssub.s32 %s19, %s26
    %s33 = sor.u32 %s31, %s32
    %p34 = scmp.eq.s32.totalorder %s33, 0
    %s36 = sadd.s32 %s35, 1
    %s37 = scalar_select %p34, %s35, %s36
    %p40 = pneg %p34
    %p41 = scmp.eq.s32.totalorder %s11, 1
    %p42 = por %p40, %p41
    %p43 = scmp.ne.s32.totalorder %s35, %s38
    %p44 = scmp.eq.s32.totalorder %s11, 0
    %p45 = por %p43, %p44
    %p46 = scmp.ne.s32.totalorder %s35, %s38
    %p47 = scmp.eq.s32.totalorder %s16, 1
    %p48 = por %p46, %p47
    %p49 = scmp.ne.s32.totalorder %s38, %s39
    %p50 = scmp.eq.s32.totalorder %s16, 0
    %p51 = por %p49, %p50
    %p52 = scmp.ne.s32.totalorder %s38, %s39
    %p53 = scmp.eq.s32.totalorder %s17, 1
    %p54 = por %p52, %p53
    %p56 = scmp.ne.s32.totalorder %s39, %s55
    %p57 = scmp.eq.s32.totalorder %s17, 0
    %p58 = por %p56, %p57
    %s59 = ssub.s32 %s18, %s30
    %s60 = ssub.s32 %s19, %s26
    %s61 = sor.u32 %s59, %s60
    %p62 = scmp.eq.s32.totalorder %s61, 0
    %s64 = sadd.s32 %s63, 1
    %s65 = scalar_select %p62, %s63, %s64
    %p68 = pneg %p62
    %p69 = scmp.eq.s32.totalorder %s11, 1
    %p70 = por %p68, %p69
    %p71 = scmp.ne.s32.totalorder %s63, %s66
    %p72 = scmp.eq.s32.totalorder %s11, 0
    %p73 = por %p71, %p72
    %p74 = scmp.ne.s32.totalorder %s63, %s66
    %p75 = scmp.eq.s32.totalorder %s16, 1
    %p76 = por %p74, %p75
    %p77 = scmp.ne.s32.totalorder %s66, %s67
    %p78 = scmp.eq.s32.totalorder %s16, 0
    %p79 = por %p77, %p78
    %p80 = scmp.ne.s32.totalorder %s66, %s67
    %p81 = scmp.eq.s32.totalorder %s17, 1
    %p82 = por %p80, %p81
    %p84 = scmp.ne.s32.totalorder %s67, %s83
    %p85 = scmp.eq.s32.totalorder %s17, 0
    %p86 = por %p84, %p85
    %s88 = sadd.s32 %s87, 1
    %p91 = scmp.eq.s32.totalorder %s11, 1
    %p92 = scmp.ne.s32.totalorder %s87, %s89
    %p93 = scmp.eq.s32.totalorder %s11, 0
    %p94 = por %p92, %p93
    %p95 = scmp.ne.s32.totalorder %s87, %s89
    %p96 = scmp.eq.s32.totalorder %s16, 1
    %p97 = por %p95, %p96
    %p98 = scmp.ne.s32.totalorder %s89, %s90
    %p99 = scmp.eq.s32.totalorder %s16, 0
    %p100 = por %p98, %p99
    %p101 = scmp.ne.s32.totalorder %s89, %s90
    %p102 = scmp.eq.s32.totalorder %s17, 1
    %p103 = por %p101, %p102
    %p105 = scmp.ne.s32.totalorder %s90, %s104
    %p106 = scmp.eq.s32.totalorder %s17, 0
    %p107 = por %p105, %p106
    %s109 = sadd.s32 %s108, 1
    %p112 = scmp.eq.s32.totalorder %s11, 1
    %p113 = scmp.ne.s32.totalorder %s108, %s110
    %p114 = scmp.eq.s32.totalorder %s11, 0
    %p115 = por %p113, %p114
    %p116 = scmp.ne.s32.totalorder %s108, %s110
    %p117 = scmp.eq.s32.totalorder %s16, 1
    %p118 = por %p116, %p117
    %p119 = scmp.ne.s32.totalorder %s110, %s111
    %p120 = scmp.eq.s32.totalorder %s16, 0
    %p121 = por %p119, %p120
    %p122 = scmp.ne.s32.totalorder %s110, %s111
    %p123 = scmp.eq.s32.totalorder %s17, 1
    %p124 = por %p122, %p123
    %p126 = scmp.ne.s32.totalorder %s111, %s125
    %p127 = scmp.eq.s32.totalorder %s17, 0
    %p128 = por %p126, %p127
    %s130 = sadd.s32 %s129, 1
    %p133 = scmp.eq.s32.totalorder %s11, 1
    %p134 = scmp.ne.s32.totalorder %s129, %s131
    %p135 = scmp.eq.s32.totalorder %s11, 0
    %p136 = por %p134, %p135
    %p137 = scmp.ne.s32.totalorder %s129, %s131
    %p138 = scmp.eq.s32.totalorder %s16, 1
    %p139 = por %p137, %p138
    %p140 = scmp.ne.s32.totalorder %s131, %s132
    %p141 = scmp.eq.s32.totalorder %s16, 0
    %p142 = por %p140, %p141
    %p143 = scmp.ne.s32.totalorder %s131, %s132
    %p144 = scmp.eq.s32.totalorder %s17, 1
    %p145 = por %p143, %p144
    %p147 = scmp.ne.s32.totalorder %s132, %s146
    %p148 = scmp.eq.s32.totalorder %s17, 0
    %p149 = por %p147, %p148
    %s150 = ssub.s32 %s18, %s30
    %s151 = ssub.s32 %s19, %s26
    %s152 = sor.u32 %s150, %s151
    %p153 = scmp.eq.s32.totalorder %s152, 0
    %s155 = sadd.s32 %s154, 1
    %s156 = scalar_select %p153, %s154, %s155
    %p159 = pneg %p153
    %p160 = scmp.eq.s32.totalorder %s11, 1
    %p161 = por %p159, %p160
    %p162 = scmp.ne.s32.totalorder %s154, %s157
    %p163 = scmp.eq.s32.totalorder %s11, 0
    %p164 = por %p162, %p163
    %p165 = scmp.ne.s32.totalorder %s154, %s157
    %p166 = scmp.eq.s32.totalorder %s16, 1
    %p167 = por %p165, %p166
    %p168 = scmp.ne.s32.totalorder %s157, %s158
    %p169 = scmp.eq.s32.totalorder %s16, 0
    %p170 = por %p168, %p169
    %p171 = scmp.ne.s32.totalorder %s157, %s158
    %p172 = scmp.eq.s32.totalorder %s17, 1
    %p173 = por %p171, %p172
    %p175 = scmp.ne.s32.totalorder %s158, %s174
    %p176 = scmp.eq.s32.totalorder %s17, 0
    %p177 = por %p175, %p176
    %p178 = scmp.le.s32.totalorder 1, %s11
    %p179 = scmp.lt.s32.totalorder %s11, 3
    %p180 = pnand %p178, %p179
    %p181 = pneg %p180
    // Predicated region
    $region9: #{root_forward.1} parent=5 // pred_check
      _
    $region10: #{root_forward.1} parent=5 // pred_check_branch
      %183 = sbr.rel (%p180) target = $region12
    $region11: #{root_forward.1} parent=5 // pred_region
      %s184 = ssub.s32 %s11, 1
      // Predicated region
      $region13: #{root_forward.1} parent=11 // pred_check
        %p185 = pneg %p100
      $region14: #{root_forward.1} parent=11 // pred_check_branch
        %187 = sbr.rel (%p185) target = $region16
      $region15: #{root_forward.1} parent=11 // pred_region
        _
      $region16: #{root_forward.1} parent=11 // pred_fallthru
        _
      // Predicated region
      $region17: #{root_forward.1} parent=11 // pred_check
        %p188 = pneg %p121
      $region18: #{root_forward.1} parent=11 // pred_check_branch
        %190 = sbr.rel (%p188) target = $region20
      $region19: #{root_forward.1} parent=11 // pred_region
        _
      $region20: #{root_forward.1} parent=11 // pred_fallthru
        _
      // Predicated region
      $region21: #{root_forward.1} parent=11 // pred_check
        %p191 = pneg %p142
      $region22: #{root_forward.1} parent=11 // pred_check_branch
        %193 = sbr.rel (%p191) target = $region24
      $region23: #{root_forward.1} parent=11 // pred_region
        _
      $region24: #{root_forward.1} parent=11 // pred_fallthru
        _
    $region12: #{root_forward.1} parent=5 // pred_fallthru
      _
    %p194 = scmp.lt.s32.totalorder %s11, 2
    // Predicated region
    $region25: #{root_forward.1} parent=5 // pred_check
      %p195 = pneg %p194
    $region26: #{root_forward.1} parent=5 // pred_check_branch
      %197 = sbr.rel (%p195) target = $region28
    $region27: #{root_forward.1} parent=5 // pred_region
      // Predicated region
      $region29: #{root_forward.1} parent=27 // pred_check
        %p198 = pneg %p45
      $region30: #{root_forward.1} parent=27 // pred_check_branch
        %200 = sbr.rel (%p198) target = $region32
      $region31: #{root_forward.1} parent=27 // pred_region
        %s201 = smul.u32 2, %s19
        %p202 = scmp.lt.s32.totalorder %s18, 1
        %s203 = scalar_select %p202, %s18, 1
        %p204 = scmp.lt.s32.totalorder %s201, 1
        %s205 = scalar_select %p204, %s201, 1
        %s206 = smul.addr %s203, 2
        %s207 = sadd.s32 %s205, %s206
        %s208 = smul.addr %s207, 4
        %s209 = scalar_lea.vmem %s0, %s208
        %s210 = smul.u32 2, %s19
      $region32: #{root_forward.1} parent=27 // pred_fallthru
        _
      // Predicated region
      $region33: #{root_forward.1} parent=27 // pred_check
        %p211 = pneg %p73
      $region34: #{root_forward.1} parent=27 // pred_check_branch
        %213 = sbr.rel (%p211) target = $region36
      $region35: #{root_forward.1} parent=27 // pred_region
        %s214 = smul.u32 2, %s19
        %p215 = scmp.lt.s32.totalorder %s18, 1
        %s216 = scalar_select %p215, %s18, 1
        %p217 = scmp.lt.s32.totalorder %s214, 1
        %s218 = scalar_select %p217, %s214, 1
        %s219 = smul.addr %s216, 2
        %s220 = sadd.s32 %s218, %s219
        %s221 = smul.addr %s220, 4
        %s222 = scalar_lea.vmem %s1, %s221
        %s223 = smul.u32 2, %s19
      $region36: #{root_forward.1} parent=27 // pred_fallthru
        _
    $region28: #{root_forward.1} parent=5 // pred_fallthru
      _
    %p224 = scmp.le.s32.totalorder 1, %s11
    %p225 = scmp.lt.s32.totalorder %s11, 3
    %p226 = pnand %p224, %p225
    %p227 = pneg %p226
    // Predicated region
    $region37: #{root_forward.1} parent=5 // pred_check
      _
    $region38: #{root_forward.1} parent=5 // pred_check_branch
      %229 = sbr.rel (%p226) target = $region40
    $region39: #{root_forward.1} parent=5 // pred_region
      %s230 = ssub.s32 %s11, 1
      %s231 = smul.u32 2, %s21
      %p232 = scmp.lt.s32.totalorder %s20, 1
      %s233 = scalar_select %p232, %s20, 1
      %p234 = scmp.lt.s32.totalorder %s231, 1
      %s235 = scalar_select %p234, %s231, 1
      %s236 = smul.addr %s233, 2
      %s237 = sadd.s32 %s235, %s236
      %s238 = smul.addr %s237, 4
      %s239 = scalar_lea.vmem %s0, %s238
      %p240 = pneg %p51
      %p241 = pneg %p48
      %s242 = smul.u32 2, %s21
      %p243 = scmp.lt.s32.totalorder %s20, 1
      %s244 = scalar_select %p243, %s20, 1
      %p245 = scmp.lt.s32.totalorder %s242, 1
      %s246 = scalar_select %p245, %s242, 1
      %s247 = smul.addr %s244, 2
      %s248 = sadd.s32 %s246, %s247
      %s249 = smul.addr %s248, 4
      %s250 = scalar_lea.vmem %s1, %s249
      %p251 = pneg %p79
      %p252 = pneg %p76
      %p253 = pneg %p100
      %p254 = pneg %p97
      %p255 = pneg %p121
      %p256 = pneg %p118
      %p257 = pneg %p142
      %p258 = pneg %p139
      %p259 = pneg %p170
      %p260 = pneg %p167
      %s261 = smul.u32 2, %s21
      %p262 = scmp.lt.s32.totalorder %s20, 1
      %s263 = scalar_select %p262, %s20, 1
      %p264 = scmp.lt.s32.totalorder %s261, 1
      %s265 = scalar_select %p264, %s261, 1
      %s266 = smul.addr %s263, 2
      %s267 = sadd.s32 %s265, %s266
      %s268 = smul.addr %s267, 4
      %s269 = scalar_lea.vmem %s5, %s268
      %s270 = smul.u32 2, %s21
      %p271 = scmp.lt.s32.totalorder %s20, 1
      %s272 = scalar_select %p271, %s20, 1
      %p273 = scmp.lt.s32.totalorder %s270, 1
      %s274 = scalar_select %p273, %s270, 1
      %s275 = smul.addr %s272, 2
      %s276 = sadd.s32 %s274, %s275
      %s277 = smul.addr %s276, 4
      %s278 = scalar_lea.vmem %s0, %s277
      %s279 = smul.u32 2, %s21
      %s280 = smul.u32 2, %s21
      %p281 = scmp.lt.s32.totalorder %s20, 1
      %s282 = scalar_select %p281, %s20, 1
      %p283 = scmp.lt.s32.totalorder %s280, 1
      %s284 = scalar_select %p283, %s280, 1
      %s285 = smul.addr %s282, 2
      %s286 = sadd.s32 %s284, %s285
      %s287 = smul.addr %s286, 4
      %s288 = scalar_lea.vmem %s1, %s287
      %s289 = smul.u32 2, %s21
      %s290 = smul.u32 2, %s21
      %p291 = scmp.lt.s32.totalorder %s20, 1
      %s292 = scalar_select %p291, %s20, 1
      %p293 = scmp.lt.s32.totalorder %s290, 1
      %s294 = scalar_select %p293, %s290, 1
      %s295 = smul.addr %s292, 2
      %s296 = sadd.s32 %s294, %s295
      %s297 = smul.addr %s296, 4
      %s298 = scalar_lea.vmem %s5, %s297
      %s299 = smul.u32 2, %s21
      %v300 = vld [vmem:[%s278] sm:$0xff]
      %v301 = vld [vmem:[%s2] sm:$0xf]
      %303 = vset.pattern.permute.xlu0 0
      %304 = vperm.xlu0 %303, %v301
      %v305 = vpop.permute.xlu0 %304
      %v308 = vlaneseq
      %v309 = vshrl.u32 %v308, 7
      %v310 = vsub.s32 0, %v309
      %v311 = vrot.slane %v300, %v310
      %v312 = vlaneseq
      %v313 = vshrl.u32 %v312, 7
      %v314 = vsub.s32 4, %v313
      %v315 = vrot.slane %v300, %v314
      %v318 = vlaneseq
      %v319 = vshrl.u32 %v318, 7
      %v320 = vsub.s32 0, %v319
      %v321 = vrot.slane %v311, %v320
      %v322 = vlaneseq
      %v323 = vshrl.u32 %v322, 7
      %v324 = vsub.s32 0, %v323
      %v325 = vrot.slane %v315, %v324
      %v326 = vmul.f32 %v305, %v321
      %v327 = vmul.f32 %v305, %v325
      %328 = vset.pattern.permute.xlu0 1
      %329 = vperm.xlu0 %328, %v301
      %v330 = vpop.permute.xlu0 %329
      %v332 = vlaneseq
      %v333 = vshrl.u32 %v332, 7
      %v334 = vsub.s32 1, %v333
      %v335 = vrot.slane %v300, %v334
      %v336 = vlaneseq
      %v337 = vshrl.u32 %v336, 7
      %v338 = vsub.s32 5, %v337
      %v339 = vrot.slane %v300, %v338
      %v342 = vlaneseq
      %v343 = vshrl.u32 %v342, 7
      %v344 = vsub.s32 1, %v343
      %v345 = vrot.slane %v335, %v344
      %v346 = vlaneseq
      %v347 = vshrl.u32 %v346, 7
      %v348 = vsub.s32 1, %v347
      %v349 = vrot.slane %v339, %v348
      %v350 = vmul.f32 %v330, %v345
      %v351 = vmul.f32 %v330, %v349
      %v352 = vadd.f32 %v326, %v350
      %v353 = vadd.f32 %v327, %v351
      %354 = vset.pattern.permute.xlu0 2
      %355 = vperm.xlu0 %354, %v301
      %v356 = vpop.permute.xlu0 %355
      %v358 = vlaneseq
      %v359 = vshrl.u32 %v358, 7
      %v360 = vsub.s32 2, %v359
      %v361 = vrot.slane %v300, %v360
      %v362 = vlaneseq
      %v363 = vshrl.u32 %v362, 7
      %v364 = vsub.s32 6, %v363
      %v365 = vrot.slane %v300, %v364
      %v368 = vlaneseq
      %v369 = vshrl.u32 %v368, 7
      %v370 = vsub.s32 2, %v369
      %v371 = vrot.slane %v361, %v370
      %v372 = vlaneseq
      %v373 = vshrl.u32 %v372, 7
      %v374 = vsub.s32 2, %v373
      %v375 = vrot.slane %v365, %v374
      %v376 = vmul.f32 %v356, %v371
      %v377 = vmul.f32 %v356, %v375
      %v378 = vadd.f32 %v352, %v376
      %v379 = vadd.f32 %v353, %v377
      %380 = vset.pattern.permute.xlu0 3
      %381 = vperm.xlu0 %380, %v301
      %v382 = vpop.permute.xlu0 %381
      %v384 = vlaneseq
      %v385 = vshrl.u32 %v384, 7
      %v386 = vsub.s32 3, %v385
      %v387 = vrot.slane %v300, %v386
      %v388 = vlaneseq
      %v389 = vshrl.u32 %v388, 7
      %v390 = vsub.s32 7, %v389
      %v391 = vrot.slane %v300, %v390
      %v394 = vlaneseq
      %v395 = vshrl.u32 %v394, 7
      %v396 = vsub.s32 3, %v395
      %v397 = vrot.slane %v387, %v396
      %v398 = vlaneseq
      %v399 = vshrl.u32 %v398, 7
      %v400 = vsub.s32 3, %v399
      %v401 = vrot.slane %v391, %v400
      %v402 = vmul.f32 %v382, %v397
      %v403 = vmul.f32 %v382, %v401
      %v404 = vadd.f32 %v378, %v402
      %v405 = vadd.f32 %v379, %v403
      %v406 = vld [vmem:[%s288] sm:$0xff]
      %v407 = vld [vmem:[%s3] sm:$0xf]
      %409 = vset.pattern.permute.xlu0 0
      %410 = vperm.xlu0 %409, %v407
      %v411 = vpop.permute.xlu0 %410
      %v414 = vlaneseq
      %v415 = vshrl.u32 %v414, 7
      %v416 = vsub.s32 0, %v415
      %v417 = vrot.slane %v406, %v416
      %v418 = vlaneseq
      %v419 = vshrl.u32 %v418, 7
      %v420 = vsub.s32 4, %v419
      %v421 = vrot.slane %v406, %v420
      %v424 = vlaneseq
      %v425 = vshrl.u32 %v424, 7
      %v426 = vsub.s32 0, %v425
      %v427 = vrot.slane %v417, %v426
      %v428 = vlaneseq
      %v429 = vshrl.u32 %v428, 7
      %v430 = vsub.s32 0, %v429
      %v431 = vrot.slane %v421, %v430
      %v432 = vmul.f32 %v411, %v427
      %v433 = vmul.f32 %v411, %v431
      %v434 = vadd.f32 %v404, %v432
      %v435 = vadd.f32 %v405, %v433
      %436 = vset.pattern.permute.xlu0 1
      %437 = vperm.xlu0 %436, %v407
      %v438 = vpop.permute.xlu0 %437
      %v440 = vlaneseq
      %v441 = vshrl.u32 %v440, 7
      %v442 = vsub.s32 1, %v441
      %v443 = vrot.slane %v406, %v442
      %v444 = vlaneseq
      %v445 = vshrl.u32 %v444, 7
      %v446 = vsub.s32 5, %v445
      %v447 = vrot.slane %v406, %v446
      %v450 = vlaneseq
      %v451 = vshrl.u32 %v450, 7
      %v452 = vsub.s32 1, %v451
      %v453 = vrot.slane %v443, %v452
      %v454 = vlaneseq
      %v455 = vshrl.u32 %v454, 7
      %v456 = vsub.s32 1, %v455
      %v457 = vrot.slane %v447, %v456
      %v458 = vmul.f32 %v438, %v453
      %v459 = vmul.f32 %v438, %v457
      %v460 = vadd.f32 %v434, %v458
      %v461 = vadd.f32 %v435, %v459
      %462 = vset.pattern.permute.xlu0 2
      %463 = vperm.xlu0 %462, %v407
      %v464 = vpop.permute.xlu0 %463
      %v466 = vlaneseq
      %v467 = vshrl.u32 %v466, 7
      %v468 = vsub.s32 2, %v467
      %v469 = vrot.slane %v406, %v468
      %v470 = vlaneseq
      %v471 = vshrl.u32 %v470, 7
      %v472 = vsub.s32 6, %v471
      %v473 = vrot.slane %v406, %v472
      %v476 = vlaneseq
      %v477 = vshrl.u32 %v476, 7
      %v478 = vsub.s32 2, %v477
      %v479 = vrot.slane %v469, %v478
      %v480 = vlaneseq
      %v481 = vshrl.u32 %v480, 7
      %v482 = vsub.s32 2, %v481
      %v483 = vrot.slane %v473, %v482
      %v484 = vmul.f32 %v464, %v479
      %v485 = vmul.f32 %v464, %v483
      %v486 = vadd.f32 %v460, %v484
      %v487 = vadd.f32 %v461, %v485
      %488 = vset.pattern.permute.xlu0 3
      %489 = vperm.xlu0 %488, %v407
      %v490 = vpop.permute.xlu0 %489
      %v492 = vlaneseq
      %v493 = vshrl.u32 %v492, 7
      %v494 = vsub.s32 3, %v493
      %v495 = vrot.slane %v406, %v494
      %v496 = vlaneseq
      %v497 = vshrl.u32 %v496, 7
      %v498 = vsub.s32 7, %v497
      %v499 = vrot.slane %v406, %v498
      %v502 = vlaneseq
      %v503 = vshrl.u32 %v502, 7
      %v504 = vsub.s32 3, %v503
      %v505 = vrot.slane %v495, %v504
      %v506 = vlaneseq
      %v507 = vshrl.u32 %v506, 7
      %v508 = vsub.s32 3, %v507
      %v509 = vrot.slane %v499, %v508
      %v510 = vmul.f32 %v490, %v505
      %v511 = vmul.f32 %v490, %v509
      %v512 = vadd.f32 %v486, %v510
      %v513 = vadd.f32 %v487, %v511
      %v514 = vld [vmem:[%s4] sm:$0xf]
      %516 = vset.pattern.permute.xlu0 0
      %517 = vperm.xlu0 %516, %v514
      %v518 = vpop.permute.xlu0 %517
      %v520 = vadd.f32 %v512, %v518
      %v521 = vadd.f32 %v513, %v518
      %v522 = vcombine.high %v300, %v300
      %v524 = vadd.f32 %v520, %v300
      %v525 = vadd.f32 %v521, %v522
      %v526 = vmax.f32 %v524, 0.0
      %v527 = vmax.f32 %v525, 0.0
      %v530 = vcombine.low %v526, %v527
      %532 = vst [vmem:[%s298] sm:$0xff] %v530
      %s533 = smul.u32 2, %s21
      %p534 = scmp.lt.s32.totalorder %s20, 1
      %s535 = scalar_select %p534, %s20, 1
      %p536 = scmp.lt.s32.totalorder %s533, 1
      %s537 = scalar_select %p536, %s533, 1
      %s538 = smul.addr %s535, 2
      %s539 = sadd.s32 %s537, %s538
      %s540 = smul.addr %s539, 4
      %s541 = scalar_lea.vmem %s5, %s540
      // Predicated region
      $region41: #{root_forward.1} parent=39 // pred_check
        %p542 = pneg %p167
      $region42: #{root_forward.1} parent=39 // pred_check_branch
        %544 = sbr.rel (%p542) target = $region44
      $region43: #{root_forward.1} parent=39 // pred_region
        %s545 = smul.u32 2, %s21
      $region44: #{root_forward.1} parent=39 // pred_fallthru
        _
    $region40: #{root_forward.1} parent=5 // pred_fallthru
      _
    %p546 = scmp.le.s32.totalorder 2, %s11
    // Predicated region
    $region45: #{root_forward.1} parent=5 // pred_check
      %p547 = pneg %p546
    $region46: #{root_forward.1} parent=5 // pred_check_branch
      %549 = sbr.rel (%p547) target = $region48
    $region47: #{root_forward.1} parent=5 // pred_region
      %s550 = ssub.s32 %s11, 2
      // Predicated region
      $region49: #{root_forward.1} parent=47 // pred_check
        %p551 = pneg %p173
      $region50: #{root_forward.1} parent=47 // pred_check_branch
        %553 = sbr.rel (%p551) target = $region52
      $region51: #{root_forward.1} parent=47 // pred_region
        %s554 = smul.u32 2, %s23
        %p555 = scmp.lt.s32.totalorder %s22, 1
        %s556 = scalar_select %p555, %s22, 1
        %p557 = scmp.lt.s32.totalorder %s554, 1
        %s558 = scalar_select %p557, %s554, 1
        %s559 = smul.addr %s556, 2
        %s560 = sadd.s32 %s558, %s559
        %s561 = smul.addr %s560, 4
        %s562 = scalar_lea.vmem %s5, %s561
      $region52: #{root_forward.1} parent=47 // pred_fallthru
        _
    $region48: #{root_forward.1} parent=5 // pred_fallthru
      _
  $region6: #{root_forward.1} parent=0 // loop_footer
    %s15 = sadd.s32 1, %s11
  $region7: #{root_forward.1} parent=0 // loop_footer_branch
    %10 = sbr.rel target = $region3
  $region8: #{root_forward.1} parent=0 // loop_exit
    _

</llo_original>
